<compile_context>
chip_gen: v5e
topology: v5e:2x2
jax: 0.10.0
libtpu: 0.0.40
codegen_flags: <defaults>
</compile_context>

<pallas_src>
import jax
import jax.numpy as jnp
from jax.experimental import pallas as pl
from jax.experimental.pallas import tpu as pltpu

NUM_CLASSES = 8
OVERLAP_THRESH = 0.5
NEGPOS_RATIO = 3
VARIANCE = (0.1, 0.2)
_NEG_FILL = -1.0e30     # pad value ranking below every real conf_logP (>= 0)


def _round_up(x, m):
    return ((x + m - 1) // m) * m


def _pick_tile(m, target):
    """Largest lane-aligned (multiple of 128) tile <= target dividing m, else m."""
    if m <= target or m % 128 != 0:
        return m
    t = (target // 128) * 128
    while t >= 128:
        if m % t == 0:
            return t
        t -= 128
    return m


# ---------------------------------------------------------------------------
# Pass 1: per-prior terms (LSE, class gather, smooth-L1) + per-batch partials
# grid = (B, M // TM)
# ---------------------------------------------------------------------------
def _per_prior_kernel(x_max_ref, conf_ref, conf_t_ref, loc_p_ref, loc_t_ref,
                      ce_ref, v_ref, sl1_ref, npos_ref):
    t = pl.program_id(1)

    @pl.when(t == 0)
    def _init():
        sl1_ref[...] = jnp.zeros_like(sl1_ref)
        npos_ref[...] = jnp.zeros_like(npos_ref)

    x_max = x_max_ref[0]                              # SMEM scalar (hoisted max)
    conf = conf_ref[0].astype(jnp.float32)            # [C, TM], priors on lanes
    conf_t = conf_t_ref[0]                            # [1, TM] int32
    num_classes = conf.shape[0]

    # log_sum_exp with a single GLOBAL max, exactly the torch utility.
    lse = jnp.log(jnp.sum(jnp.exp(conf - x_max), axis=0, keepdims=True)) + x_max

    # gather conf[target] with an unrolled per-class select (no one-hot tensor).
    gathered = jnp.zeros_like(lse)
    for c in range(num_classes):
        gathered = gathered + jnp.where(conf_t == c, conf[c:c + 1, :], 0.0)

    ce = lse - gathered                               # per-prior CE  [1, TM]
    pos = conf_t > 0
    posf = pos.astype(jnp.float32)
    ce_ref[0] = ce
    v_ref[0] = jnp.where(pos, 0.0, ce)                # positives zeroed for mining

    # Smooth-L1 on positives (sum only; normalization happens outside).
    d = loc_p_ref[0].astype(jnp.float32) - loc_t_ref[0].astype(jnp.float32)
    ad = jnp.abs(d)
    sl1 = jnp.where(ad < 1.0, 0.5 * d * d, ad - 0.5)  # [4, TM]
    sl1_ref[...] += jnp.sum(sl1 * posf)
    npos_ref[...] += jnp.sum(posf)


# ---------------------------------------------------------------------------
# Pass 2: chunked pairwise hard-negative ranking + selected-CE partial sums
# grid = (B, M_pad // TI, M_pad // TJ)   (j is the reduction axis)
# ---------------------------------------------------------------------------
def _rank_select_kernel(num_neg_ref, v_i_ref, v_j_ref, ce_ref, conf_t_ref,
                        ce_sum_ref, n_sel_ref, rank_acc):
    b = pl.program_id(0)
    i = pl.program_id(1)
    j = pl.program_id(2)

    @pl.when(jnp.logical_and(i == 0, j == 0))
    def _init_outputs():
        ce_sum_ref[...] = jnp.zeros_like(ce_sum_ref)
        n_sel_ref[...] = jnp.zeros_like(n_sel_ref)

    @pl.when(j == 0)
    def _init_rank():
        rank_acc[...] = jnp.zeros_like(rank_acc)

    # TODO(synk): could replace the O(M^2) pairwise count with a per-batch
    # threshold search (binary-search the k-th largest over ~20 passes of M);
    # kept exact pairwise ranking to match torch's stable descending sort.
    vi = v_i_ref[0]                                   # [1, TI]  lane-dense i tile
    vj = v_j_ref[0]                                   # [TJ, 1]  sublane j tile
    tj, ti = vj.shape[0], vi.shape[1]
    i_idx = i * ti + jax.lax.broadcasted_iota(jnp.int32, (tj, ti), 1)
    j_idx = j * tj + jax.lax.broadcasted_iota(jnp.int32, (tj, ti), 0)
    # descending-sort rank: strictly-greater OR equal-with-lower-index
    before = (vj > vi) | ((vj == vi) & (j_idx < i_idx))      # [TJ, TI]
    rank_acc[...] += jnp.sum(before.astype(jnp.float32), axis=0, keepdims=True)

    @pl.when(j == pl.num_programs(2) - 1)
    def _finalize_tile():
        ce = ce_ref[0]                                # [1, TI]
        pos = conf_t_ref[0] > 0                       # [1, TI]
        nn = num_neg_ref[b].astype(jnp.float32)
        neg = rank_acc[...] < nn
        sel = jnp.logical_or(pos, neg)
        ce_sum_ref[...] += jnp.sum(jnp.where(sel, ce, 0.0))
        n_sel_ref[...] += jnp.sum(sel.astype(jnp.float32))


# ---------------------------------------------------------------------------
# Wrapper: layout plumbing, hoisted global max, two pallas_calls, final divides
# ---------------------------------------------------------------------------
def multibox_loss_pallas(loc_pred, conf_pred, loc_t, conf_t, negpos_ratio):
    B, M, C = conf_pred.shape

    # Lane-dense layout: prior axis last (bf16 inputs stay bf16; cast in-kernel).
    conf_T = jnp.transpose(conf_pred, (0, 2, 1))             # [B, C, M]
    loc_p_T = jnp.transpose(loc_pred, (0, 2, 1))             # [B, 4, M]
    loc_t_T = jnp.transpose(loc_t, (0, 2, 1))                # [B, 4, M]
    conf_t_T = conf_t.astype(jnp.int32).reshape(B, 1, M)     # [B, 1, M]

    # Hoisted global max (cheap XLA reduce) -> SMEM scalar input.
    x_max = jnp.max(conf_pred).astype(jnp.float32).reshape(1)

    tm = _pick_tile(M, 2048)
    smem_spec = pl.BlockSpec(memory_space=pltpu.MemorySpace.SMEM)

    ce, v, sl1_sum, n_pos = pl.pallas_call(
        _per_prior_kernel,
        grid=(B, M // tm),
        in_specs=[
            smem_spec,                                               # x_max
            pl.BlockSpec((1, C, tm), lambda b, t: (b, 0, t)),        # conf
            pl.BlockSpec((1, 1, tm), lambda b, t: (b, 0, t)),        # conf_t
            pl.BlockSpec((1, 4, tm), lambda b, t: (b, 0, t)),        # loc_p
            pl.BlockSpec((1, 4, tm), lambda b, t: (b, 0, t)),        # loc_t
        ],
        out_specs=(
            pl.BlockSpec((1, 1, tm), lambda b, t: (b, 0, t)),        # ce
            pl.BlockSpec((1, 1, tm), lambda b, t: (b, 0, t)),        # v
            pl.BlockSpec((1, 1, 1), lambda b, t: (b, 0, 0)),         # sl1 (per-batch)
            pl.BlockSpec((1, 1, 1), lambda b, t: (b, 0, 0)),         # n_pos (per-batch)
        ),
        out_shape=(
            jax.ShapeDtypeStruct((B, 1, M), jnp.float32),
            jax.ShapeDtypeStruct((B, 1, M), jnp.float32),
            jax.ShapeDtypeStruct((B, 1, 1), jnp.float32),
            jax.ShapeDtypeStruct((B, 1, 1), jnp.float32),
        ),
        compiler_params=pltpu.CompilerParams(
            dimension_semantics=("parallel", "arbitrary")),
    )(x_max, conf_T, conf_t_T, loc_p_T, loc_t_T)

    # Per-batch negative budget: clamp(ratio * num_pos, max=M-1) (torch semantics).
    num_neg = jnp.minimum((negpos_ratio * n_pos[:, 0, 0]).astype(jnp.int32), M - 1)

    # Pad the prior axis to lane-aligned tiles so the rank pass uses fixed
    # (TI, TJ) blocks.  Pads get v=-1e30 (rank below every real prior, never
    # selected), ce=0, conf_t=0 -> they contribute nothing.
    if M > 1024:
        ti, tj = 1024, 512
        m_pad = _round_up(M, 1024)
    else:
        m_pad = _round_up(M, 128)
        ti, tj = m_pad, m_pad
    pad = m_pad - M
    if pad:
        v_p = jnp.pad(v, ((0, 0), (0, 0), (0, pad)), constant_values=_NEG_FILL)
        ce_p = jnp.pad(ce, ((0, 0), (0, 0), (0, pad)))
        conf_t_p = jnp.pad(conf_t_T, ((0, 0), (0, 0), (0, pad)))
    else:
        v_p, ce_p, conf_t_p = v, ce, conf_t_T
    v_col = jnp.transpose(v_p, (0, 2, 1))                    # [B, M_pad, 1]

    ce_sum, n_sel = pl.pallas_call(
        _rank_select_kernel,
        grid=(B, m_pad // ti, m_pad // tj),
        in_specs=[
            smem_spec,                                               # num_neg [B]
            pl.BlockSpec((1, 1, ti), lambda b, i, j: (b, 0, i)),     # v (i side)
            pl.BlockSpec((1, tj, 1), lambda b, i, j: (b, j, 0)),     # v (j side)
            pl.BlockSpec((1, 1, ti), lambda b, i, j: (b, 0, i)),     # ce
            pl.BlockSpec((1, 1, ti), lambda b, i, j: (b, 0, i)),     # conf_t
        ],
        out_specs=(
            pl.BlockSpec((1, 1, 1), lambda b, i, j: (b, 0, 0)),      # ce_sum
            pl.BlockSpec((1, 1, 1), lambda b, i, j: (b, 0, 0)),      # n_sel
        ),
        out_shape=(
            jax.ShapeDtypeStruct((B, 1, 1), jnp.float32),
            jax.ShapeDtypeStruct((B, 1, 1), jnp.float32),
        ),
        scratch_shapes=[pltpu.VMEM((1, ti), jnp.float32)],
        compiler_params=pltpu.CompilerParams(
            dimension_semantics=("parallel", "arbitrary", "arbitrary")),
    )(num_neg, v_p, v_col, ce_p, conf_t_p)

    n_pos_total = jnp.sum(n_pos)     # NOTE: 0 positives -> inf/nan, same as torch
    n_sel_total = jnp.sum(n_sel)
    # F.smooth_l1_loss mean over (num_pos*4) then /N ; F.cross_entropy mean over
    # selected priors then /N  -- exactly the torch module's normalization.
    loss_l = (jnp.sum(sl1_sum) / (4.0 * n_pos_total)) / n_pos_total
    loss_c = (jnp.sum(ce_sum) / n_sel_total) / n_pos_total
    return loss_l, loss_c


# ----------------------------------------------------------------------------
# SSD "match" step in plain JAX (glue: data-dependent gt<->prior assignment)
# ----------------------------------------------------------------------------
def _point_form(priors):  # (cx,cy,w,h) -> (x1,y1,x2,y2)
    return jnp.concatenate([priors[:, :2] - priors[:, 2:] / 2.0,
                            priors[:, :2] + priors[:, 2:] / 2.0], axis=1)


def _jaccard(box_a, box_b):  # [A,4] x [B,4] xyxy -> [A,B]
    max_xy = jnp.minimum(box_a[:, None, 2:], box_b[None, :, 2:])
    min_xy = jnp.maximum(box_a[:, None, :2], box_b[None, :, :2])
    wh = jnp.clip(max_xy - min_xy, 0.0, None)
    inter = wh[..., 0] * wh[..., 1]
    area_a = ((box_a[:, 2] - box_a[:, 0]) * (box_a[:, 3] - box_a[:, 1]))[:, None]
    area_b = ((box_b[:, 2] - box_b[:, 0]) * (box_b[:, 3] - box_b[:, 1]))[None, :]
    return inter / (area_a + area_b - inter)


def _encode(matched, priors, variances):
    g_cxcy = (matched[:, :2] + matched[:, 2:]) / 2.0 - priors[:, :2]
    g_cxcy = g_cxcy / (variances[0] * priors[:, 2:])
    g_wh = (matched[:, 2:] - matched[:, :2]) / priors[:, 2:]
    g_wh = jnp.log(g_wh) / variances[1]
    return jnp.concatenate([g_cxcy, g_wh], axis=1)


def _match_one(threshold, truths, priors, variances, labels):
    overlaps = _jaccard(truths, _point_form(priors))          # [G, M]
    best_prior_idx = jnp.argmax(overlaps, axis=1)              # [G]
    best_truth_overlap = jnp.max(overlaps, axis=0)             # [M]
    best_truth_idx = jnp.argmax(overlaps, axis=0)              # [M]
    best_truth_overlap = best_truth_overlap.at[best_prior_idx].set(2.0)
    # TODO(synk): torch's loop resolves duplicate best_prior_idx with
    # "last gt wins"; jnp scatter order for duplicates is unspecified
    # (only differs on measure-zero IoU ties).
    best_truth_idx = best_truth_idx.at[best_prior_idx].set(
        jnp.arange(truths.shape[0], dtype=best_truth_idx.dtype))
    matches = truths[best_truth_idx]                           # [M, 4]
    conf = (labels[best_truth_idx] + 1.0).astype(jnp.int32)
    conf = jnp.where(best_truth_overlap < threshold, 0, conf)
    loc = _encode(matches, priors, variances)
    return loc, conf


class MultiBoxLossPallas:
    """JAX/Pallas port of net/losses/ssd_loss.py::MultiBoxLoss (forward only)."""

    def __init__(self, num_classes, overlap_thresh, negpos_ratio):
        self.num_classes = num_classes
        self.threshold = overlap_thresh
        self.negpos_ratio = negpos_ratio
        self.variance = VARIANCE

    def __call__(self, pred, targets):
        loc_pred, conf_pred, priors = pred
        match = lambda t: _match_one(self.threshold, t[:, :4], priors,
                                     self.variance, t[:, 4])
        loc_t, conf_t = jax.vmap(match)(targets)
        return multibox_loss_pallas(loc_pred, conf_pred, loc_t, conf_t,
                                    self.negpos_ratio)


# ----------------------------------------------------------------------------
# Pure-JAX reference (for sanity checking the kernels)
# ----------------------------------------------------------------------------
def _multibox_loss_ref(loc_pred, conf_pred, loc_t, conf_t, negpos_ratio):
    B, M, C = conf_pred.shape
    pos = conf_t > 0
    x_max = jnp.max(conf_pred)
    lse = jnp.log(jnp.sum(jnp.exp(conf_pred - x_max), axis=-1)) + x_max
    gathered = jnp.take_along_axis(conf_pred, conf_t[..., None], axis=-1)[..., 0]
    ce = lse - gathered
    v = jnp.where(pos, 0.0, ce)
    order = jnp.argsort(-v, axis=1)          # stable descending sort
    idx_rank = jnp.argsort(order, axis=1)
    num_pos = jnp.sum(pos, axis=1, keepdims=True)
    num_neg = jnp.minimum(negpos_ratio * num_pos, M - 1)
    sel = pos | (idx_rank < num_neg)
    d = loc_pred - loc_t
    ad = jnp.abs(d)
    sl1 = jnp.where(ad < 1.0, 0.5 * d * d, ad - 0.5)
    n_pos = jnp.sum(pos).astype(jnp.float32)
    loss_l = jnp.sum(sl1 * pos[..., None]) / (4.0 * n_pos) / n_pos
    loss_c = jnp.sum(jnp.where(sel, ce, 0.0)) / jnp.sum(sel) / n_pos
    return loss_l, loss_c


if __name__ == "__main__":
    B, G, C = 2, 3, NUM_CLASSES
    # 8x8 grid of priors (cx, cy, w, h), M = 64
    gx, gy = jnp.meshgrid(jnp.arange(8) + 0.5, jnp.arange(8) + 0.5, indexing="ij")
    centers = jnp.stack([gx.reshape(-1) / 8.0, gy.reshape(-1) / 8.0], axis=1)
    priors = jnp.concatenate(
        [centers, jnp.full((64, 2), 0.25, jnp.float32)], axis=1).astype(jnp.float32)
    M = priors.shape[0]

    key = jax.random.PRNGKey(0)
    k1, k2, k3, k4, k5 = jax.random.split(key, 5)
    loc_pred = jax.random.normal(k1, (B, M, 4), jnp.float32)
    conf_pred = jax.random.normal(k2, (B, M, C), jnp.float32)

    # ground-truth boxes (x1,y1,x2,y2) inside [0,1] with positive area + labels
    ctr = jax.random.uniform(k3, (B, G, 2), minval=0.25, maxval=0.75)
    wh = jax.random.uniform(k4, (B, G, 2), minval=0.15, maxval=0.4)
    boxes = jnp.concatenate([ctr - wh / 2.0, ctr + wh / 2.0], axis=-1)
    labels = jax.random.randint(k5, (B, G, 1), 0, C - 1).astype(jnp.float32)
    targets = jnp.concatenate([boxes, labels], axis=-1)   # [B, G, 5]

    loss_fn = MultiBoxLossPallas(NUM_CLASSES, OVERLAP_THRESH, NEGPOS_RATIO)
    loss_l, loss_c = loss_fn((loc_pred, conf_pred, priors), targets)
    jax.block_until_ready((loss_l, loss_c))

    # sanity check against pure-JAX reference
    match = lambda t: _match_one(OVERLAP_THRESH, t[:, :4], priors, VARIANCE, t[:, 4])
    loc_t, conf_t = jax.vmap(match)(targets)
    ref_l, ref_c = _multibox_loss_ref(loc_pred, conf_pred, loc_t, conf_t, NEGPOS_RATIO)
    assert jnp.allclose(loss_l, ref_l, rtol=1e-5, atol=1e-5), (loss_l, ref_l)
    assert jnp.allclose(loss_c, ref_c, rtol=1e-5, atol=1e-5), (loss_c, ref_c)
    assert bool(jnp.isfinite(loss_l)) and bool(jnp.isfinite(loss_c))

    print("KERNEL_OK")
</pallas_src>

<mosaic_0001>
module attributes {stable_mosaic.version = 11 : i64} {
  func.func @_per_prior_kernel(%arg0: i32, %arg1: i32, %arg2: memref<1xf32, #tpu.memory_space<smem>>, %arg3: memref<1x8x64xf32, #tpu.memory_space<vmem>>, %arg4: memref<1x1x64xi32, #tpu.memory_space<vmem>>, %arg5: memref<1x4x64xf32, #tpu.memory_space<vmem>>, %arg6: memref<1x4x64xf32, #tpu.memory_space<vmem>>, %arg7: memref<1x1x64xf32, #tpu.memory_space<vmem>>, %arg8: memref<1x1x64xf32, #tpu.memory_space<vmem>>, %arg9: memref<1x1x1xf32, #tpu.memory_space<vmem>>, %arg10: memref<1x1x1xf32, #tpu.memory_space<vmem>>) attributes {dimension_semantics = [#tpu.dimension_semantics<parallel>, #tpu.dimension_semantics<arbitrary>], iteration_bounds = array<i64: 2, 1>, scalar_prefetch = 0 : i64, scratch_operands = 0 : i64, tpu.core_type = #tpu.core_type<tc>, window_params = [{transform_indices = @transform_0, window_bounds = array<i64: 1>}, {transform_indices = @transform_1, window_bounds = array<i64: 1, 8, 64>}, {transform_indices = @transform_2, window_bounds = array<i64: 1, 1, 64>}, {transform_indices = @transform_3, window_bounds = array<i64: 1, 4, 64>}, {transform_indices = @transform_4, window_bounds = array<i64: 1, 4, 64>}, {transform_indices = @transform_5, window_bounds = array<i64: 1, 1, 64>}, {transform_indices = @transform_6, window_bounds = array<i64: 1, 1, 64>}, {transform_indices = @transform_7, window_bounds = array<i64: 1, 1, 1>}, {transform_indices = @transform_8, window_bounds = array<i64: 1, 1, 1>}]} {
    %c0_i32 = arith.constant 0 : i32
    %0 = arith.cmpi eq, %arg1, %c0_i32 : i32
    %1 = arith.extui %0 : i1 to i32
    %c0_i32_0 = arith.constant 0 : i32
    %2 = arith.cmpi ne, %1, %c0_i32_0 : i32
    scf.if %2 {
      %cst_48 = arith.constant 0.000000e+00 : f32
      %110 = vector.broadcast %cst_48 : f32 to vector<1x1x1xf32>
      %c0_49 = arith.constant 0 : index
      %c0_50 = arith.constant 0 : index
      %c0_51 = arith.constant 0 : index
      %111 = vector.load %arg9[%c0_49, %c0_50, %c0_51] : memref<1x1x1xf32, #tpu.memory_space<vmem>>, vector<1x1x1xf32>
      tpu.vector_store %arg9[%c0_49, %c0_50, %c0_51], %110 {strides = array<i32>} : memref<1x1x1xf32, #tpu.memory_space<vmem>>, vector<1x1x1xf32>,
      %cst_52 = arith.constant 0.000000e+00 : f32
      %112 = vector.broadcast %cst_52 : f32 to vector<1x1x1xf32>
      %c0_53 = arith.constant 0 : index
      %c0_54 = arith.constant 0 : index
      %c0_55 = arith.constant 0 : index
      %113 = vector.load %arg10[%c0_53, %c0_54, %c0_55] : memref<1x1x1xf32, #tpu.memory_space<vmem>>, vector<1x1x1xf32>
      tpu.vector_store %arg10[%c0_53, %c0_54, %c0_55], %112 {strides = array<i32>} : memref<1x1x1xf32, #tpu.memory_space<vmem>>, vector<1x1x1xf32>,
    } else {
    }
    %c0 = arith.constant 0 : index
    %3 = memref.load %arg2[%c0] : memref<1xf32, #tpu.memory_space<smem>>
    %c0_1 = arith.constant 0 : index
    %c0_2 = arith.constant 0 : index
    %c0_3 = arith.constant 0 : index
    %4 = vector.load %arg3[%c0_1, %c0_2, %c0_3] : memref<1x8x64xf32, #tpu.memory_space<vmem>>, vector<1x8x64xf32>
    %5 = vector.shape_cast %4 : vector<1x8x64xf32> to vector<8x64xf32>
    %c0_4 = arith.constant 0 : index
    %c0_5 = arith.constant 0 : index
    %c0_6 = arith.constant 0 : index
    %6 = vector.load %arg4[%c0_4, %c0_5, %c0_6] : memref<1x1x64xi32, #tpu.memory_space<vmem>>, vector<1x1x64xi32>
    %7 = vector.shape_cast %6 : vector<1x1x64xi32> to vector<1x64xi32>
    %8 = vector.broadcast %3 : f32 to vector<8x64xf32>
    %9 = arith.subf %5, %8 : vector<8x64xf32>
    %10 = math.exp %9 : vector<8x64xf32>
    %cst = arith.constant dense<0.000000e+00> : vector<64xf32>
    %11 = vector.multi_reduction <add>, %10, %cst [0] : vector<8x64xf32> to vector<64xf32>
    %12 = vector.shape_cast %11 : vector<64xf32> to vector<1x64xf32>
    %13 = math.log %12 : vector<1x64xf32>
    %14 = vector.broadcast %3 : f32 to vector<1x64xf32>
    %15 = arith.addf %13, %14 : vector<1x64xf32>
    %cst_7 = arith.constant 0.000000e+00 : f32
    %16 = vector.broadcast %cst_7 : f32 to vector<1x64xf32>
    %c0_i32_8 = arith.constant 0 : i32
    %17 = vector.broadcast %c0_i32_8 : i32 to vector<1x64xi32>
    %18 = arith.cmpi eq, %7, %17 : vector<1x64xi32>
    %19 = vector.extract_strided_slice %5 {offsets = [0, 0], sizes = [1, 64], strides = [1, 1]} : vector<8x64xf32> to vector<1x64xf32>
    %cst_9 = arith.constant 0.000000e+00 : f32
    %20 = vector.broadcast %cst_9 : f32 to vector<1x64xf32>
    %21 = arith.select %18, %19, %20 : vector<1x64xi1>, vector<1x64xf32>
    %22 = arith.addf %16, %21 : vector<1x64xf32>
    %c1_i32 = arith.constant 1 : i32
    %23 = vector.broadcast %c1_i32 : i32 to vector<1x64xi32>
    %24 = arith.cmpi eq, %7, %23 : vector<1x64xi32>
    %25 = vector.extract_strided_slice %5 {offsets = [1, 0], sizes = [1, 64], strides = [1, 1]} : vector<8x64xf32> to vector<1x64xf32>
    %cst_10 = arith.constant 0.000000e+00 : f32
    %26 = vector.broadcast %cst_10 : f32 to vector<1x64xf32>
    %27 = arith.select %24, %25, %26 : vector<1x64xi1>, vector<1x64xf32>
    %28 = arith.addf %22, %27 : vector<1x64xf32>
    %c2_i32 = arith.constant 2 : i32
    %29 = vector.broadcast %c2_i32 : i32 to vector<1x64xi32>
    %30 = arith.cmpi eq, %7, %29 : vector<1x64xi32>
    %31 = vector.extract_strided_slice %5 {offsets = [2, 0], sizes = [1, 64], strides = [1, 1]} : vector<8x64xf32> to vector<1x64xf32>
    %cst_11 = arith.constant 0.000000e+00 : f32
    %32 = vector.broadcast %cst_11 : f32 to vector<1x64xf32>
    %33 = arith.select %30, %31, %32 : vector<1x64xi1>, vector<1x64xf32>
    %34 = arith.addf %28, %33 : vector<1x64xf32>
    %c3_i32 = arith.constant 3 : i32
    %35 = vector.broadcast %c3_i32 : i32 to vector<1x64xi32>
    %36 = arith.cmpi eq, %7, %35 : vector<1x64xi32>
    %37 = vector.extract_strided_slice %5 {offsets = [3, 0], sizes = [1, 64], strides = [1, 1]} : vector<8x64xf32> to vector<1x64xf32>
    %cst_12 = arith.constant 0.000000e+00 : f32
    %38 = vector.broadcast %cst_12 : f32 to vector<1x64xf32>
    %39 = arith.select %36, %37, %38 : vector<1x64xi1>, vector<1x64xf32>
    %40 = arith.addf %34, %39 : vector<1x64xf32>
    %c4_i32 = arith.constant 4 : i32
    %41 = vector.broadcast %c4_i32 : i32 to vector<1x64xi32>
    %42 = arith.cmpi eq, %7, %41 : vector<1x64xi32>
    %43 = vector.extract_strided_slice %5 {offsets = [4, 0], sizes = [1, 64], strides = [1, 1]} : vector<8x64xf32> to vector<1x64xf32>
    %cst_13 = arith.constant 0.000000e+00 : f32
    %44 = vector.broadcast %cst_13 : f32 to vector<1x64xf32>
    %45 = arith.select %42, %43, %44 : vector<1x64xi1>, vector<1x64xf32>
    %46 = arith.addf %40, %45 : vector<1x64xf32>
    %c5_i32 = arith.constant 5 : i32
    %47 = vector.broadcast %c5_i32 : i32 to vector<1x64xi32>
    %48 = arith.cmpi eq, %7, %47 : vector<1x64xi32>
    %49 = vector.extract_strided_slice %5 {offsets = [5, 0], sizes = [1, 64], strides = [1, 1]} : vector<8x64xf32> to vector<1x64xf32>
    %cst_14 = arith.constant 0.000000e+00 : f32
    %50 = vector.broadcast %cst_14 : f32 to vector<1x64xf32>
    %51 = arith.select %48, %49, %50 : vector<1x64xi1>, vector<1x64xf32>
    %52 = arith.addf %46, %51 : vector<1x64xf32>
    %c6_i32 = arith.constant 6 : i32
    %53 = vector.broadcast %c6_i32 : i32 to vector<1x64xi32>
    %54 = arith.cmpi eq, %7, %53 : vector<1x64xi32>
    %55 = vector.extract_strided_slice %5 {offsets = [6, 0], sizes = [1, 64], strides = [1, 1]} : vector<8x64xf32> to vector<1x64xf32>
    %cst_15 = arith.constant 0.000000e+00 : f32
    %56 = vector.broadcast %cst_15 : f32 to vector<1x64xf32>
    %57 = arith.select %54, %55, %56 : vector<1x64xi1>, vector<1x64xf32>
    %58 = arith.addf %52, %57 : vector<1x64xf32>
    %c7_i32 = arith.constant 7 : i32
    %59 = vector.broadcast %c7_i32 : i32 to vector<1x64xi32>
    %60 = arith.cmpi eq, %7, %59 : vector<1x64xi32>
    %61 = vector.extract_strided_slice %5 {offsets = [7, 0], sizes = [1, 64], strides = [1, 1]} : vector<8x64xf32> to vector<1x64xf32>
    %cst_16 = arith.constant 0.000000e+00 : f32
    %62 = vector.broadcast %cst_16 : f32 to vector<1x64xf32>
    %63 = arith.select %60, %61, %62 : vector<1x64xi1>, vector<1x64xf32>
    %64 = arith.addf %58, %63 : vector<1x64xf32>
    %65 = arith.subf %15, %64 : vector<1x64xf32>
    %c0_i32_17 = arith.constant 0 : i32
    %66 = vector.broadcast %c0_i32_17 : i32 to vector<1x64xi32>
    %67 = arith.cmpi sgt, %7, %66 : vector<1x64xi32>
    %68 = arith.extui %67 : vector<1x64xi1> to vector<1x64xi32>
    %69 = arith.sitofp %68 : vector<1x64xi32> to vector<1x64xf32>
    %c0_18 = arith.constant 0 : index
    %c0_19 = arith.constant 0 : index
    %c0_20 = arith.constant 0 : index
    %70 = vector.load %arg7[%c0_18, %c0_19, %c0_20] : memref<1x1x64xf32, #tpu.memory_space<vmem>>, vector<1x1x64xf32>
    %71 = vector.shape_cast %70 : vector<1x1x64xf32> to vector<1x64xf32>
    %72 = vector.shape_cast %65 : vector<1x64xf32> to vector<1x1x64xf32>
    tpu.vector_store %arg7[%c0_18, %c0_19, %c0_20], %72 {strides = array<i32>} : memref<1x1x64xf32, #tpu.memory_space<vmem>>, vector<1x1x64xf32>,
    %cst_21 = arith.constant 0.000000e+00 : f32
    %73 = vector.broadcast %cst_21 : f32 to vector<1x64xf32>
    %74 = arith.select %67, %73, %65 : vector<1x64xi1>, vector<1x64xf32>
    %c0_22 = arith.constant 0 : index
    %c0_23 = arith.constant 0 : index
    %c0_24 = arith.constant 0 : index
    %75 = vector.load %arg8[%c0_22, %c0_23, %c0_24] : memref<1x1x64xf32, #tpu.memory_space<vmem>>, vector<1x1x64xf32>
    %76 = vector.shape_cast %75 : vector<1x1x64xf32> to vector<1x64xf32>
    %77 = vector.shape_cast %74 : vector<1x64xf32> to vector<1x1x64xf32>
    tpu.vector_store %arg8[%c0_22, %c0_23, %c0_24], %77 {strides = array<i32>} : memref<1x1x64xf32, #tpu.memory_space<vmem>>, vector<1x1x64xf32>,
    %c0_25 = arith.constant 0 : index
    %c0_26 = arith.constant 0 : index
    %c0_27 = arith.constant 0 : index
    %78 = vector.load %arg5[%c0_25, %c0_26, %c0_27] : memref<1x4x64xf32, #tpu.memory_space<vmem>>, vector<1x4x64xf32>
    %79 = vector.shape_cast %78 : vector<1x4x64xf32> to vector<4x64xf32>
    %c0_28 = arith.constant 0 : index
    %c0_29 = arith.constant 0 : index
    %c0_30 = arith.constant 0 : index
    %80 = vector.load %arg6[%c0_28, %c0_29, %c0_30] : memref<1x4x64xf32, #tpu.memory_space<vmem>>, vector<1x4x64xf32>
    %81 = vector.shape_cast %80 : vector<1x4x64xf32> to vector<4x64xf32>
    %82 = arith.subf %79, %81 : vector<4x64xf32>
    %83 = math.absf %82 : vector<4x64xf32>
    %cst_31 = arith.constant 1.000000e+00 : f32
    %84 = vector.broadcast %cst_31 : f32 to vector<4x64xf32>
    %85 = arith.cmpf olt, %83, %84 : vector<4x64xf32>
    %cst_32 = arith.constant 5.000000e-01 : f32
    %86 = vector.broadcast %cst_32 : f32 to vector<4x64xf32>
    %87 = arith.mulf %86, %82 : vector<4x64xf32>
    %88 = arith.mulf %87, %82 : vector<4x64xf32>
    %cst_33 = arith.constant 5.000000e-01 : f32
    %89 = vector.broadcast %cst_33 : f32 to vector<4x64xf32>
    %90 = arith.subf %83, %89 : vector<4x64xf32>
    %91 = arith.select %85, %88, %90 : vector<4x64xi1>, vector<4x64xf32>
    %c0_34 = arith.constant 0 : index
    %c0_35 = arith.constant 0 : index
    %c0_36 = arith.constant 0 : index
    %92 = vector.load %arg9[%c0_34, %c0_35, %c0_36] : memref<1x1x1xf32, #tpu.memory_space<vmem>>, vector<1x1x1xf32>
    %93 = vector.broadcast %69 : vector<1x64xf32> to vector<4x64xf32>
    %94 = arith.mulf %91, %93 : vector<4x64xf32>
    %95 = vector.shape_cast %94 : vector<4x64xf32> to vector<1x4x64xf32>
    %cst_37 = arith.constant dense<0.000000e+00> : vector<1xf32>
    %96 = vector.multi_reduction <add>, %95, %cst_37 [1, 2] : vector<1x4x64xf32> to vector<1xf32>
    %97 = vector.shape_cast %96 : vector<1xf32> to vector<1x1x1xf32>
    %98 = vector.extract %97[0, 0, 0] : f32 from vector<1x1x1xf32>
    %99 = vector.broadcast %98 : f32 to vector<1x1x1xf32>
    %100 = arith.addf %92, %99 : vector<1x1x1xf32>
    %c0_38 = arith.constant 0 : index
    %c0_39 = arith.constant 0 : index
    %c0_40 = arith.constant 0 : index
    %101 = vector.load %arg9[%c0_38, %c0_39, %c0_40] : memref<1x1x1xf32, #tpu.memory_space<vmem>>, vector<1x1x1xf32>
    tpu.vector_store %arg9[%c0_38, %c0_39, %c0_40], %100 {strides = array<i32>} : memref<1x1x1xf32, #tpu.memory_space<vmem>>, vector<1x1x1xf32>,
    %c0_41 = arith.constant 0 : index
    %c0_42 = arith.constant 0 : index
    %c0_43 = arith.constant 0 : index
    %102 = vector.load %arg10[%c0_41, %c0_42, %c0_43] : memref<1x1x1xf32, #tpu.memory_space<vmem>>, vector<1x1x1xf32>
    %103 = vector.shape_cast %69 : vector<1x64xf32> to vector<1x1x64xf32>
    %cst_44 = arith.constant dense<0.000000e+00> : vector<1xf32>
    %104 = vector.multi_reduction <add>, %103, %cst_44 [1, 2] : vector<1x1x64xf32> to vector<1xf32>
    %105 = vector.shape_cast %104 : vector<1xf32> to vector<1x1x1xf32>
    %106 = vector.extract %105[0, 0, 0] : f32 from vector<1x1x1xf32>
    %107 = vector.broadcast %106 : f32 to vector<1x1x1xf32>
    %108 = arith.addf %102, %107 : vector<1x1x1xf32>
    %c0_45 = arith.constant 0 : index
    %c0_46 = arith.constant 0 : index
    %c0_47 = arith.constant 0 : index
    %109 = vector.load %arg10[%c0_45, %c0_46, %c0_47] : memref<1x1x1xf32, #tpu.memory_space<vmem>>, vector<1x1x1xf32>
    tpu.vector_store %arg10[%c0_45, %c0_46, %c0_47], %108 {strides = array<i32>} : memref<1x1x1xf32, #tpu.memory_space<vmem>>, vector<1x1x1xf32>,
    return
  }
  func.func @transform_0(%arg0: i32, %arg1: i32) -> i32 {
    %c0_i32 = arith.constant 0 : i32
    %c0_i32_0 = arith.constant 0 : i32
    return %c0_i32 : i32
  }
  func.func @transform_1(%arg0: i32, %arg1: i32) -> (i32, i32, i32) {
    %c0_i32 = arith.constant 0 : i32
    %c0_i32_0 = arith.constant 0 : i32
    return %arg0, %c0_i32, %arg1 : i32, i32, i32
  }
  func.func @transform_2(%arg0: i32, %arg1: i32) -> (i32, i32, i32) {
    %c0_i32 = arith.constant 0 : i32
    %c0_i32_0 = arith.constant 0 : i32
    return %arg0, %c0_i32, %arg1 : i32, i32, i32
  }
  func.func @transform_3(%arg0: i32, %arg1: i32) -> (i32, i32, i32) {
    %c0_i32 = arith.constant 0 : i32
    %c0_i32_0 = arith.constant 0 : i32
    return %arg0, %c0_i32, %arg1 : i32, i32, i32
  }
  func.func @transform_4(%arg0: i32, %arg1: i32) -> (i32, i32, i32) {
    %c0_i32 = arith.constant 0 : i32
    %c0_i32_0 = arith.constant 0 : i32
    return %arg0, %c0_i32, %arg1 : i32, i32, i32
  }
  func.func @transform_5(%arg0: i32, %arg1: i32) -> (i32, i32, i32) {
    %c0_i32 = arith.constant 0 : i32
    %c0_i32_0 = arith.constant 0 : i32
    return %arg0, %c0_i32, %arg1 : i32, i32, i32
  }
  func.func @transform_6(%arg0: i32, %arg1: i32) -> (i32, i32, i32) {
    %c0_i32 = arith.constant 0 : i32
    %c0_i32_0 = arith.constant 0 : i32
    return %arg0, %c0_i32, %arg1 : i32, i32, i32
  }
  func.func @transform_7(%arg0: i32, %arg1: i32) -> (i32, i32, i32) {
    %c0_i32 = arith.constant 0 : i32
    %c0_i32_0 = arith.constant 0 : i32
    %c0_i32_1 = arith.constant 0 : i32
    return %arg0, %c0_i32, %c0_i32_0 : i32, i32, i32
  }
  func.func @transform_8(%arg0: i32, %arg1: i32) -> (i32, i32, i32) {
    %c0_i32 = arith.constant 0 : i32
    %c0_i32_0 = arith.constant 0 : i32
    %c0_i32_1 = arith.constant 0 : i32
    return %arg0, %c0_i32, %c0_i32_0 : i32, i32, i32
  }
}

</mosaic_0001>

<llo_original>
// kernel: tpu_custom_call.1
$region0: #{tpu_custom_call.1}
  #allocation0 [shape = 'u32[]', space=smem, size = 0x4, offset = 0x4, fixed_abs, tag = 'smem constant byte address 0x4 - core index']
  #allocation1 [shape = 'u32[72,128]{1,0:T(1,128)}', space=vmem, size = 0x9000, scoped, tag = 'internal scratch']
  #allocation2 [shape = 'f32[1]{0:T(128)S(6)}', space=smem, size = 0x200, scoped, tag = 'scoped memory for tpu_custom_call.1']
  %s0 = inlined_call_operand.<no memory space> [shape: f32[1], index: 0, kind: input, shape index: {}]
  %s1 = inlined_call_operand.hbm [shape: f32[2,8,64], index: 1, kind: input, shape index: {}]
  %s2 = inlined_call_operand.vmem [shape: s32[2,1,64], index: 2, kind: input, shape index: {}]
  %s3 = inlined_call_operand.hbm [shape: f32[2,4,64], index: 3, kind: input, shape index: {}]
  %s4 = inlined_call_operand.hbm [shape: f32[2,4,64], index: 4, kind: input, shape index: {}]
  %s5 = inlined_call_operand.hbm [shape: f32[2,1,64], index: 5, kind: output, shape index: {0}]
  %s6 = inlined_call_operand.hbm [shape: f32[2,1,64], index: 6, kind: output, shape index: {1}]
  %s7 = inlined_call_operand.vmem [shape: f32[2,1,1], index: 7, kind: output, shape index: {2}]
  %s8 = inlined_call_operand.vmem [shape: f32[2,1,1], index: 8, kind: output, shape index: {3}]
  %9 = xla_tuple %s5, %s6, %s7, %s8
  %s10 = sld [smem:[#allocation0]]
  $region93: #{tpu_custom_call.1} parent=0
    _
  %s12 = ssub.s32 1, %s10
  %s13 = scalar_select 0, %s12, %s10
  %14 = sst [smem:[#allocation2]] %s0
  $region1: #{tpu_custom_call.1} parent=0
    #allocation3 [shape = 'u8[8192]{0}', space=vmem, size = 0x2000, scoped, tag = 'input window, operand 1']
    #allocation4 [shape = 's32[2]{0}', space=sflag, size = 0x8, scoped, tag = 'scoped memory for tpu_custom_call.1']
    #allocation5 [shape = 's32[2]{0}', space=sflag, size = 0x8, scoped, tag = 'scoped memory for tpu_custom_call.1']
    #allocation6 [shape = 'u8[4096]{0}', space=vmem, size = 0x1000, scoped, tag = 'input window, operand 3']
    #allocation7 [shape = 's32[2]{0}', space=sflag, size = 0x8, scoped, tag = 'scoped memory for tpu_custom_call.1']
    #allocation8 [shape = 'u8[4096]{0}', space=vmem, size = 0x1000, scoped, tag = 'input window, operand 4']
    #allocation9 [shape = 'u8[1024]{0}', space=vmem, size = 0x400, scoped, tag = 'output window, operand 0']
    #allocation10 [shape = 'u8[1024]{0}', space=vmem, size = 0x400, scoped, tag = 'output window, operand 1']
    #allocation11 [shape = 's32[2]{0}', space=sflag, size = 0x8, scoped, tag = 'scoped memory for tpu_custom_call.1']
    %15 = vsyncpa [#allocation4], 0
    %s16 = scalar_lea.sflag [#allocation4], 1
    %17 = vsyncpa %s16, 0
    %18 = vsyncpa [#allocation7], 0
    %s19 = scalar_lea.sflag [#allocation7], 1
    %20 = vsyncpa %s19, 0
    %21 = vsyncpa [#allocation5], 0
    %s22 = scalar_lea.sflag [#allocation5], 1
    %23 = vsyncpa %s22, 0
    %24 = vsyncpa [#allocation11], 0
    %s25 = scalar_lea.sflag [#allocation11], 1
    %26 = vsyncpa %s25, 0
    loop: start=0, step=1, limit=4
    $region2: #{tpu_custom_call.1} parent=1 // loop_pre_header
      _
    $region3: #{tpu_custom_call.1} parent=1 // loop_header
      %s28 = sphi 0, %s32
      %p29 = scmp.ge.s32.totalorder %s28, 4
      %s35 = sphi 0, %s47
      %s36 = sphi 0, %s43
      %s37 = sphi 0, %s35
      %s38 = sphi 0, %s36
      %s39 = sphi 0, %s37
      %s40 = sphi 0, %s38
      %s48 = sphi 0, %s48
      %s50 = sphi 0, %s48
      %s51 = sphi 0, %s50
      %s65 = sphi 0, %s51
      %s73 = sphi 0, %s75
      %s76 = sphi 0, %s73
      %s77 = sphi 0, %s76
      %s93 = sphi 0, %s77
      %s101 = sphi 0, %s103
      %s104 = sphi 0, %s101
      %s105 = sphi 0, %s104
      %s121 = sphi 0, %s105
      %s129 = sphi 0, %s131
      %s132 = sphi 0, %s129
      %s133 = sphi 0, %s132
      %s149 = sphi 0, %s133
      %s157 = sphi 0, %s159
      %s160 = sphi 0, %s157
      %s161 = sphi 0, %s160
      %s177 = sphi 0, %s161
      %s185 = sphi 0, %s187
      %s188 = sphi 0, %s185
      %s189 = sphi 0, %s188
      %s205 = sphi 0, %s189
      %s213 = sphi 0, %s215
      %s216 = sphi 0, %s213
      %s217 = sphi 0, %s216
      %s233 = sphi 0, %s217
      %s239 = sphi 0, %s241
      %s242 = sphi 0, %s239
      %s243 = sphi 0, %s242
      %s259 = sphi 0, %s243
      %s265 = sphi 0, %s267
      %s268 = sphi 0, %s265
      %s269 = sphi 0, %s268
      %s285 = sphi 0, %s269
    $region4: #{tpu_custom_call.1} parent=1 // loop_header_branch
      %31 = sbr.rel (%p29) target = $region8
    $region5: #{tpu_custom_call.1} parent=1 // loop_body
      %s33 = ssub.s32 %s28, 1
      %s34 = ssub.s32 %s28, 2
      %s41 = sadd.s32 1, %s36
      %p42 = scmp.ge.s32.totalorder %s41, 1
      %s43 = scalar_select %p42, 0, %s41
      %s44 = sadd.s32 1, %s35
      %s45 = scalar_select %p42, %s44, %s35
      %p46 = scmp.ge.s32.totalorder %s45, 2
      %s47 = scalar_select %p46, 0, %s45
      %s49 = sadd.s32 %s48, 1
      %p52 = scmp.eq.s32.totalorder %s28, 1
      %p53 = scmp.ne.s32.totalorder %s48, %s50
      %p54 = scmp.eq.s32.totalorder %s28, 0
      %p55 = por %p53, %p54
      %p56 = scmp.ne.s32.totalorder %s48, %s50
      %p57 = scmp.eq.s32.totalorder %s33, 1
      %p58 = por %p56, %p57
      %p59 = scmp.ne.s32.totalorder %s50, %s51
      %p60 = scmp.eq.s32.totalorder %s33, 0
      %p61 = por %p59, %p60
      %p62 = scmp.ne.s32.totalorder %s50, %s51
      %p63 = scmp.eq.s32.totalorder %s34, 1
      %p64 = por %p62, %p63
      %p66 = scmp.ne.s32.totalorder %s51, %s65
      %p67 = scmp.eq.s32.totalorder %s34, 0
      %p68 = por %p66, %p67
      %s69 = ssub.s32 %s35, %s47
      %s70 = ssub.s32 %s36, %s43
      %s71 = sor.u32 %s69, %s70
      %p72 = scmp.eq.s32.totalorder %s71, 0
      %s74 = sadd.s32 %s73, 1
      %s75 = scalar_select %p72, %s73, %s74
      %p78 = pneg %p72
      %p79 = scmp.eq.s32.totalorder %s28, 1
      %p80 = por %p78, %p79
      %p81 = scmp.ne.s32.totalorder %s73, %s76
      %p82 = scmp.eq.s32.totalorder %s28, 0
      %p83 = por %p81, %p82
      %p84 = scmp.ne.s32.totalorder %s73, %s76
      %p85 = scmp.eq.s32.totalorder %s33, 1
      %p86 = por %p84, %p85
      %p87 = scmp.ne.s32.totalorder %s76, %s77
      %p88 = scmp.eq.s32.totalorder %s33, 0
      %p89 = por %p87, %p88
      %p90 = scmp.ne.s32.totalorder %s76, %s77
      %p91 = scmp.eq.s32.totalorder %s34, 1
      %p92 = por %p90, %p91
      %p94 = scmp.ne.s32.totalorder %s77, %s93
      %p95 = scmp.eq.s32.totalorder %s34, 0
      %p96 = por %p94, %p95
      %s97 = ssub.s32 %s35, %s47
      %s98 = ssub.s32 %s36, %s43
      %s99 = sor.u32 %s97, %s98
      %p100 = scmp.eq.s32.totalorder %s99, 0
      %s102 = sadd.s32 %s101, 1
      %s103 = scalar_select %p100, %s101, %s102
      %p106 = pneg %p100
      %p107 = scmp.eq.s32.totalorder %s28, 1
      %p108 = por %p106, %p107
      %p109 = scmp.ne.s32.totalorder %s101, %s104
      %p110 = scmp.eq.s32.totalorder %s28, 0
      %p111 = por %p109, %p110
      %p112 = scmp.ne.s32.totalorder %s101, %s104
      %p113 = scmp.eq.s32.totalorder %s33, 1
      %p114 = por %p112, %p113
      %p115 = scmp.ne.s32.totalorder %s104, %s105
      %p116 = scmp.eq.s32.totalorder %s33, 0
      %p117 = por %p115, %p116
      %p118 = scmp.ne.s32.totalorder %s104, %s105
      %p119 = scmp.eq.s32.totalorder %s34, 1
      %p120 = por %p118, %p119
      %p122 = scmp.ne.s32.totalorder %s105, %s121
      %p123 = scmp.eq.s32.totalorder %s34, 0
      %p124 = por %p122, %p123
      %s125 = ssub.s32 %s35, %s47
      %s126 = ssub.s32 %s36, %s43
      %s127 = sor.u32 %s125, %s126
      %p128 = scmp.eq.s32.totalorder %s127, 0
      %s130 = sadd.s32 %s129, 1
      %s131 = scalar_select %p128, %s129, %s130
      %p134 = pneg %p128
      %p135 = scmp.eq.s32.totalorder %s28, 1
      %p136 = por %p134, %p135
      %p137 = scmp.ne.s32.totalorder %s129, %s132
      %p138 = scmp.eq.s32.totalorder %s28, 0
      %p139 = por %p137, %p138
      %p140 = scmp.ne.s32.totalorder %s129, %s132
      %p141 = scmp.eq.s32.totalorder %s33, 1
      %p142 = por %p140, %p141
      %p143 = scmp.ne.s32.totalorder %s132, %s133
      %p144 = scmp.eq.s32.totalorder %s33, 0
      %p145 = por %p143, %p144
      %p146 = scmp.ne.s32.totalorder %s132, %s133
      %p147 = scmp.eq.s32.totalorder %s34, 1
      %p148 = por %p146, %p147
      %p150 = scmp.ne.s32.totalorder %s133, %s149
      %p151 = scmp.eq.s32.totalorder %s34, 0
      %p152 = por %p150, %p151
      %s153 = ssub.s32 %s35, %s47
      %s154 = ssub.s32 %s36, %s43
      %s155 = sor.u32 %s153, %s154
      %p156 = scmp.eq.s32.totalorder %s155, 0
      %s158 = sadd.s32 %s157, 1
      %s159 = scalar_select %p156, %s157, %s158
      %p162 = pneg %p156
      %p163 = scmp.eq.s32.totalorder %s28, 1
      %p164 = por %p162, %p163
      %p165 = scmp.ne.s32.totalorder %s157, %s160
      %p166 = scmp.eq.s32.totalorder %s28, 0
      %p167 = por %p165, %p166
      %p168 = scmp.ne.s32.totalorder %s157, %s160
      %p169 = scmp.eq.s32.totalorder %s33, 1
      %p170 = por %p168, %p169
      %p171 = scmp.ne.s32.totalorder %s160, %s161
      %p172 = scmp.eq.s32.totalorder %s33, 0
      %p173 = por %p171, %p172
      %p174 = scmp.ne.s32.totalorder %s160, %s161
      %p175 = scmp.eq.s32.totalorder %s34, 1
      %p176 = por %p174, %p175
      %p178 = scmp.ne.s32.totalorder %s161, %s177
      %p179 = scmp.eq.s32.totalorder %s34, 0
      %p180 = por %p178, %p179
      %s181 = ssub.s32 %s35, %s47
      %s182 = ssub.s32 %s36, %s43
      %s183 = sor.u32 %s181, %s182
      %p184 = scmp.eq.s32.totalorder %s183, 0
      %s186 = sadd.s32 %s185, 1
      %s187 = scalar_select %p184, %s185, %s186
      %p190 = pneg %p184
      %p191 = scmp.eq.s32.totalorder %s28, 1
      %p192 = por %p190, %p191
      %p193 = scmp.ne.s32.totalorder %s185, %s188
      %p194 = scmp.eq.s32.totalorder %s28, 0
      %p195 = por %p193, %p194
      %p196 = scmp.ne.s32.totalorder %s185, %s188
      %p197 = scmp.eq.s32.totalorder %s33, 1
      %p198 = por %p196, %p197
      %p199 = scmp.ne.s32.totalorder %s188, %s189
      %p200 = scmp.eq.s32.totalorder %s33, 0
      %p201 = por %p199, %p200
      %p202 = scmp.ne.s32.totalorder %s188, %s189
      %p203 = scmp.eq.s32.totalorder %s34, 1
      %p204 = por %p202, %p203
      %p206 = scmp.ne.s32.totalorder %s189, %s205
      %p207 = scmp.eq.s32.totalorder %s34, 0
      %p208 = por %p206, %p207
      %s209 = ssub.s32 %s35, %s47
      %s210 = ssub.s32 %s36, %s43
      %s211 = sor.u32 %s209, %s210
      %p212 = scmp.eq.s32.totalorder %s211, 0
      %s214 = sadd.s32 %s213, 1
      %s215 = scalar_select %p212, %s213, %s214
      %p218 = pneg %p212
      %p219 = scmp.eq.s32.totalorder %s28, 1
      %p220 = por %p218, %p219
      %p221 = scmp.ne.s32.totalorder %s213, %s216
      %p222 = scmp.eq.s32.totalorder %s28, 0
      %p223 = por %p221, %p222
      %p224 = scmp.ne.s32.totalorder %s213, %s216
      %p225 = scmp.eq.s32.totalorder %s33, 1
      %p226 = por %p224, %p225
      %p227 = scmp.ne.s32.totalorder %s216, %s217
      %p228 = scmp.eq.s32.totalorder %s33, 0
      %p229 = por %p227, %p228
      %p230 = scmp.ne.s32.totalorder %s216, %s217
      %p231 = scmp.eq.s32.totalorder %s34, 1
      %p232 = por %p230, %p231
      %p234 = scmp.ne.s32.totalorder %s217, %s233
      %p235 = scmp.eq.s32.totalorder %s34, 0
      %p236 = por %p234, %p235
      %s237 = ssub.s32 %s35, %s47
      %p238 = scmp.eq.s32.totalorder %s237, 0
      %s240 = sadd.s32 %s239, 1
      %s241 = scalar_select %p238, %s239, %s240
      %p244 = pneg %p238
      %p245 = scmp.eq.s32.totalorder %s28, 1
      %p246 = por %p244, %p245
      %p247 = scmp.ne.s32.totalorder %s239, %s242
      %p248 = scmp.eq.s32.totalorder %s28, 0
      %p249 = por %p247, %p248
      %p250 = scmp.ne.s32.totalorder %s239, %s242
      %p251 = scmp.eq.s32.totalorder %s33, 1
      %p252 = por %p250, %p251
      %p253 = scmp.ne.s32.totalorder %s242, %s243
      %p254 = scmp.eq.s32.totalorder %s33, 0
      %p255 = por %p253, %p254
      %p256 = scmp.ne.s32.totalorder %s242, %s243
      %p257 = scmp.eq.s32.totalorder %s34, 1
      %p258 = por %p256, %p257
      %p260 = scmp.ne.s32.totalorder %s243, %s259
      %p261 = scmp.eq.s32.totalorder %s34, 0
      %p262 = por %p260, %p261
      %s263 = ssub.s32 %s35, %s47
      %p264 = scmp.eq.s32.totalorder %s263, 0
      %s266 = sadd.s32 %s265, 1
      %s267 = scalar_select %p264, %s265, %s266
      %p270 = pneg %p264
      %p271 = scmp.eq.s32.totalorder %s28, 1
      %p272 = por %p270, %p271
      %p273 = scmp.ne.s32.totalorder %s265, %s268
      %p274 = scmp.eq.s32.totalorder %s28, 0
      %p275 = por %p273, %p274
      %p276 = scmp.ne.s32.totalorder %s265, %s268
      %p277 = scmp.eq.s32.totalorder %s33, 1
      %p278 = por %p276, %p277
      %p279 = scmp.ne.s32.totalorder %s268, %s269
      %p280 = scmp.eq.s32.totalorder %s33, 0
      %p281 = por %p279, %p280
      %p282 = scmp.ne.s32.totalorder %s268, %s269
      %p283 = scmp.eq.s32.totalorder %s34, 1
      %p284 = por %p282, %p283
      %p286 = scmp.ne.s32.totalorder %s269, %s285
      %p287 = scmp.eq.s32.totalorder %s34, 0
      %p288 = por %p286, %p287
      %p289 = scmp.le.s32.totalorder 1, %s28
      %p290 = scmp.lt.s32.totalorder %s28, 3
      %p291 = pnand %p289, %p290
      %p292 = pneg %p291
      // Predicated region
      $region9: #{tpu_custom_call.1} parent=5 // pred_check
        _
      $region10: #{tpu_custom_call.1} parent=5 // pred_check_branch
        %294 = sbr.rel (%p291) target = $region12
      $region11: #{tpu_custom_call.1} parent=5 // pred_region
        %s295 = ssub.s32 %s28, 1
        // Predicated region
        $region13: #{tpu_custom_call.1} parent=11 // pred_check
          %p296 = pneg %p61
        $region14: #{tpu_custom_call.1} parent=11 // pred_check_branch
          %298 = sbr.rel (%p296) target = $region16
        $region15: #{tpu_custom_call.1} parent=11 // pred_region
          _
        $region16: #{tpu_custom_call.1} parent=11 // pred_fallthru
          _
      $region12: #{tpu_custom_call.1} parent=5 // pred_fallthru
        _
      %p299 = scmp.lt.s32.totalorder %s28, 2
      // Predicated region
      $region17: #{tpu_custom_call.1} parent=5 // pred_check
        %p300 = pneg %p299
      $region18: #{tpu_custom_call.1} parent=5 // pred_check_branch
        %302 = sbr.rel (%p300) target = $region20
      $region19: #{tpu_custom_call.1} parent=5 // pred_region
        // Predicated region
        $region21: #{tpu_custom_call.1} parent=19 // pred_check
          %p303 = pneg %p83
        $region22: #{tpu_custom_call.1} parent=19 // pred_check_branch
          %305 = sbr.rel (%p303) target = $region24
        $region23: #{tpu_custom_call.1} parent=19 // pred_region
          %s306 = sand.u32 %s73, 1
          %s307 = scalar_lea.sflag [#allocation4], %s306
          %s308 = sand.u32 %s73, 1
          %s309 = smul.addr %s308, 8
          %s310 = scalar_lea.vmem [#allocation3], %s309
          %312 = vsyncadd %s307, 0
          %s313 = sadd.s32 %s36, %s35
          %s314 = smul.addr %s313, 8
          %s315 = scalar_lea.hbm %s1, %s314
          %s317 = sshll.u32 %s315, 4
          %s318 = int_to_ptr.hbm [resolvable:$true] %s317
          %s319 = sshll.u32 %s310, 4
          %s320 = int_to_ptr.vmem [resolvable:$true] %s319
          %322 = dma.hbm_to_vmem [thread:$0]  %s318, 128, %s320, %s307
        $region24: #{tpu_custom_call.1} parent=19 // pred_fallthru
          _
        // Predicated region
        $region25: #{tpu_custom_call.1} parent=19 // pred_check
          %p323 = pneg %p111
        $region26: #{tpu_custom_call.1} parent=19 // pred_check_branch
          %325 = sbr.rel (%p323) target = $region28
        $region27: #{tpu_custom_call.1} parent=19 // pred_region
          %p326 = scmp.lt.s32.totalorder %s35, 1
          %s327 = scalar_select %p326, %s35, 1
          %p328 = scmp.lt.s32.totalorder %s36, 0
          %s329 = scalar_select %p328, %s36, 0
          %s330 = sadd.s32 %s329, %s327
          %s331 = scalar_lea.vmem %s2, %s330
        $region28: #{tpu_custom_call.1} parent=19 // pred_fallthru
          _
        // Predicated region
        $region29: #{tpu_custom_call.1} parent=19 // pred_check
          %p332 = pneg %p139
        $region30: #{tpu_custom_call.1} parent=19 // pred_check_branch
          %334 = sbr.rel (%p332) target = $region32
        $region31: #{tpu_custom_call.1} parent=19 // pred_region
          %s335 = sand.u32 %s28, 1
          %s336 = scalar_lea.sflag [#allocation7], %s335
          %s337 = sand.u32 %s129, 1
          %s338 = smul.addr %s337, 4
          %s339 = scalar_lea.vmem [#allocation6], %s338
          %341 = vsyncadd %s336, 0
          %s342 = sadd.s32 %s36, %s35
          %s343 = smul.addr %s342, 4
          %s344 = scalar_lea.hbm %s3, %s343
          %s346 = sshll.u32 %s344, 4
          %s347 = int_to_ptr.hbm [resolvable:$true] %s346
          %s348 = sshll.u32 %s339, 4
          %s349 = int_to_ptr.vmem [resolvable:$true] %s348
          %351 = dma.hbm_to_vmem [thread:$0]  %s347, 64, %s349, %s336
        $region32: #{tpu_custom_call.1} parent=19 // pred_fallthru
          _
        // Predicated region
        $region33: #{tpu_custom_call.1} parent=19 // pred_check
          %p352 = pneg %p167
        $region34: #{tpu_custom_call.1} parent=19 // pred_check_branch
          %354 = sbr.rel (%p352) target = $region36
        $region35: #{tpu_custom_call.1} parent=19 // pred_region
          %s355 = sand.u32 %s28, 1
          %s356 = scalar_lea.sflag [#allocation7], %s355
          %s357 = sand.u32 %s157, 1
          %s358 = smul.addr %s357, 4
          %s359 = scalar_lea.vmem [#allocation8], %s358
          %361 = vsyncadd %s356, 0
          %s362 = sadd.s32 %s36, %s35
          %s363 = smul.addr %s362, 4
          %s364 = scalar_lea.hbm %s4, %s363
          %s366 = sshll.u32 %s364, 4
          %s367 = int_to_ptr.hbm [resolvable:$true] %s366
          %s368 = sshll.u32 %s359, 4
          %s369 = int_to_ptr.vmem [resolvable:$true] %s368
          %371 = dma.hbm_to_vmem [thread:$0]  %s367, 64, %s369, %s356
        $region36: #{tpu_custom_call.1} parent=19 // pred_fallthru
          _
      $region20: #{tpu_custom_call.1} parent=5 // pred_fallthru
        _
      %p372 = scmp.le.s32.totalorder 1, %s28
      %p373 = scmp.lt.s32.totalorder %s28, 3
      %p374 = pnand %p372, %p373
      %p375 = pneg %p374
      // Predicated region
      $region37: #{tpu_custom_call.1} parent=5 // pred_check
        _
      $region38: #{tpu_custom_call.1} parent=5 // pred_check_branch
        %377 = sbr.rel (%p374) target = $region40
      $region39: #{tpu_custom_call.1} parent=5 // pred_region
        %s378 = ssub.s32 %s28, 1
        %s379 = sand.u32 %s76, 1
        %s380 = scalar_lea.sflag [#allocation4], %s379
        %s381 = sand.u32 %s76, 1
        %s382 = smul.addr %s381, 8
        %s383 = scalar_lea.vmem [#allocation3], %s382
        // Predicated region
        $region41: #{tpu_custom_call.1} parent=39 // pred_check
          %p384 = pneg %p89
        $region42: #{tpu_custom_call.1} parent=39 // pred_check_branch
          %386 = sbr.rel (%p384) target = $region44
        $region43: #{tpu_custom_call.1} parent=39 // pred_region
          %388 = dma.done %s380, 128
        $region44: #{tpu_custom_call.1} parent=39 // pred_fallthru
          _
        %s389 = sand.u32 %s33, 1
        %s390 = scalar_lea.sflag [#allocation7], %s389
        %s391 = sand.u32 %s132, 1
        %s392 = smul.addr %s391, 4
        %s393 = scalar_lea.vmem [#allocation6], %s392
        // Predicated region
        $region45: #{tpu_custom_call.1} parent=39 // pred_check
          %p394 = pneg %p145
        $region46: #{tpu_custom_call.1} parent=39 // pred_check_branch
          %396 = sbr.rel (%p394) target = $region48
        $region47: #{tpu_custom_call.1} parent=39 // pred_region
          %398 = dma.done %s390, 64
        $region48: #{tpu_custom_call.1} parent=39 // pred_fallthru
          _
        %s399 = sand.u32 %s33, 1
        %s400 = scalar_lea.sflag [#allocation7], %s399
        %s401 = sand.u32 %s160, 1
        %s402 = smul.addr %s401, 4
        %s403 = scalar_lea.vmem [#allocation8], %s402
        // Predicated region
        $region49: #{tpu_custom_call.1} parent=39 // pred_check
          %p404 = pneg %p173
        $region50: #{tpu_custom_call.1} parent=39 // pred_check_branch
          %406 = sbr.rel (%p404) target = $region52
        $region51: #{tpu_custom_call.1} parent=39 // pred_region
          %408 = dma.done %s400, 64
        $region52: #{tpu_custom_call.1} parent=39 // pred_fallthru
          _
        %p409 = pneg %p61
        %p410 = pneg %p58
        %s411 = sand.u32 %s76, 1
        %s412 = scalar_lea.sflag [#allocation4], %s411
        %s413 = sand.u32 %s76, 1
        %s414 = smul.addr %s413, 8
        %s415 = scalar_lea.vmem [#allocation3], %s414
        %p416 = pneg %p89
        %p417 = pneg %p86
        %p418 = scmp.lt.s32.totalorder %s37, 1
        %s419 = scalar_select %p418, %s37, 1
        %p420 = scmp.lt.s32.totalorder %s38, 0
        %s421 = scalar_select %p420, %s38, 0
        %s422 = sadd.s32 %s421, %s419
        %s423 = scalar_lea.vmem %s2, %s422
        %p424 = pneg %p117
        %p425 = pneg %p114
        %s426 = sand.u32 %s33, 1
        %s427 = scalar_lea.sflag [#allocation7], %s426
        %s428 = sand.u32 %s132, 1
        %s429 = smul.addr %s428, 4
        %s430 = scalar_lea.vmem [#allocation6], %s429
        %p431 = pneg %p145
        %p432 = pneg %p142
        %s433 = sand.u32 %s33, 1
        %s434 = scalar_lea.sflag [#allocation7], %s433
        %s435 = sand.u32 %s160, 1
        %s436 = smul.addr %s435, 4
        %s437 = scalar_lea.vmem [#allocation8], %s436
        %p438 = pneg %p173
        %p439 = pneg %p170
        %p440 = pneg %p201
        %p441 = pneg %p198
        %s442 = sand.u32 %s188, 1
        %s443 = scalar_lea.sflag [#allocation5], %s442
        %s444 = sand.u32 %s188, 1
        %s445 = scalar_lea.vmem [#allocation9], %s444
        %p446 = pneg %p229
        %p447 = pneg %p226
        %s448 = sand.u32 %s216, 1
        %s449 = scalar_lea.sflag [#allocation11], %s448
        %s450 = sand.u32 %s216, 1
        %s451 = scalar_lea.vmem [#allocation10], %s450
        %p452 = pneg %p255
        %p453 = pneg %p252
        %p454 = scmp.lt.s32.totalorder %s37, 1
        %s455 = scalar_select %p454, %s37, 1
        %s456 = scalar_lea.vmem %s7, %s455
        %p457 = pneg %p281
        %p458 = pneg %p278
        %p459 = scmp.lt.s32.totalorder %s37, 1
        %s460 = scalar_select %p459, %s37, 1
        %s461 = scalar_lea.vmem %s8, %s460
        %p462 = scmp.lt.s32.totalorder %s37, 1
        %s463 = scalar_select %p462, %s37, 1
        %p464 = scmp.lt.s32.totalorder %s38, 0
        %s465 = scalar_select %p464, %s38, 0
        %s466 = sadd.s32 %s465, %s463
        %s467 = scalar_lea.vmem %s2, %s466
        %p468 = scmp.lt.s32.totalorder %s37, 1
        %s469 = scalar_select %p468, %s37, 1
        %s470 = scalar_lea.vmem %s7, %s469
        %p471 = scmp.lt.s32.totalorder %s37, 1
        %s472 = scalar_select %p471, %s37, 1
        %s473 = scalar_lea.vmem %s8, %s472
        %p474 = scmp.eq.s32.totalorder %s38, 0
        // Predicated region
        $region53: #{tpu_custom_call.1} parent=39 // pred_check
          %p475 = pneg %p474
        $region54: #{tpu_custom_call.1} parent=39 // pred_check_branch
          %477 = sbr.rel (%p475) target = $region56
        $region55: #{tpu_custom_call.1} parent=39 // pred_region
          %vm478 = vcmask 0
          %479 = vst.msk [vmem:[%s470] sm:$0x1] %vm478, 0.0
          %480 = vst.msk [vmem:[%s473] sm:$0x1] %vm478, 0.0
        $region56: #{tpu_custom_call.1} parent=39 // pred_fallthru
          _
        %s481 = sld [smem:[#allocation2]]
        %v482 = vld [vmem:[%s383] sm:$0xff]
        %v483 = vld [vmem:[%s467] sm:$0x1]
        %v484 = vstv %s481
        %v485 = vsub.f32 %v482, %v484
        %v486 = vmul.f32 %v485, 1.442695
        %v487 = vpow.pop %v486
        %vm488 = vcmask 523264
        %v489 = vsel %vm488, %v487, 0.0
        %v490 = vrot.slane %v489, 4
        %v491 = vadd.f32 %v489, %v490
        %v492 = vrot.slane %v491, 2
        %v493 = vadd.f32 %v491, %v492
        %v494 = vrot.slane %v493, 1
        %v495 = vadd.f32 %v493, %v494
        %v496 = vlog2.pop %v495
        %v497 = vmul.f32 %v496, 0.6931472
        %v498 = vadd.f32 %v497, %v484
        %vm499 = vcmp.eq.s32.totalorder %v483, 0
        %v500 = vsel %vm499, %v482, 0.0
        %v501 = vadd.f32 %v500, 0.0
        %vm502 = vcmp.eq.s32.totalorder %v483, 1
        %504 = vst [vmem:[#allocation1] sm:$0xff] %v482
        %s505 = scalar_lea.vmem [#allocation1], 1
        %v506 = vld [vmem:[%s505] ss:$9 sm:$0xff]
        %v508 = vsel %vm502, %v506, 0.0
        %v509 = vadd.f32 %v501, %v508
        %vm510 = vcmp.eq.s32.totalorder %v483, 2
        %511 = vst [vmem:[#allocation1] sm:$0xff] %v482
        %s512 = scalar_lea.vmem [#allocation1], 2
        %v513 = vld [vmem:[%s512] ss:$9 sm:$0xff]
        %v515 = vsel %vm510, %v513, 0.0
        %v516 = vadd.f32 %v509, %v515
        %vm517 = vcmp.eq.s32.totalorder %v483, 3
        %518 = vst [vmem:[#allocation1] sm:$0xff] %v482
        %s519 = scalar_lea.vmem [#allocation1], 3
        %v520 = vld [vmem:[%s519] ss:$9 sm:$0xff]
        %v522 = vsel %vm517, %v520, 0.0
        %v523 = vadd.f32 %v516, %v522
        %vm524 = vcmp.eq.s32.totalorder %v483, 4
        %525 = vst [vmem:[#allocation1] sm:$0xff] %v482
        %s526 = scalar_lea.vmem [#allocation1], 4
        %v527 = vld [vmem:[%s526] ss:$9 sm:$0xff]
        %v529 = vsel %vm524, %v527, 0.0
        %v530 = vadd.f32 %v523, %v529
        %vm531 = vcmp.eq.s32.totalorder %v483, 5
        %532 = vst [vmem:[#allocation1] sm:$0xff] %v482
        %s533 = scalar_lea.vmem [#allocation1], 5
        %v534 = vld [vmem:[%s533] ss:$9 sm:$0xff]
        %v536 = vsel %vm531, %v534, 0.0
        %v537 = vadd.f32 %v530, %v536
        %vm538 = vcmp.eq.s32.totalorder %v483, 6
        %539 = vst [vmem:[#allocation1] sm:$0xff] %v482
        %s540 = scalar_lea.vmem [#allocation1], 6
        %v541 = vld [vmem:[%s540] ss:$9 sm:$0xff]
        %v543 = vsel %vm538, %v541, 0.0
        %v544 = vadd.f32 %v537, %v543
        %vm545 = vcmp.eq.s32.totalorder %v483, 7
        %546 = vst [vmem:[#allocation1] sm:$0xff] %v482
        %s547 = scalar_lea.vmem [#allocation1], 7
        %v548 = vld [vmem:[%s547] ss:$9 sm:$0xff]
        %v550 = vsel %vm545, %v548, 0.0
        %v551 = vadd.f32 %v544, %v550
        %v552 = vsub.f32 %v498, %v551
        %vm553 = vcmp.gt.s32.totalorder %v483, 0
        %v554 = vsel %vm553, 1, 0
        %v555 = vcvt.s32.f32 %v554
        %vm556 = vcmask 516096
        %557 = vst.msk [vmem:[%s445] sm:$0x1] %vm556, %v552
        %v558 = vsel %vm553, 0.0, %v552
        %559 = vst.msk [vmem:[%s451] sm:$0x1] %vm556, %v558
        %v560 = vld [vmem:[%s393] sm:$0xf]
        %v561 = vld [vmem:[%s403] sm:$0xf]
        %v562 = vsub.f32 %v560, %v561
        %v563 = vand.u32 2147483647, %v562
        %vm564 = vcmp.lt.f32.partialorder %v563, 1.0
        %v565 = vmul.f32 %v562, 0.5
        %v566 = vmul.f32 %v565, %v562
        %v567 = vsub.f32 %v563, 0.5
        %v568 = vsel %vm564, %v566, %v567
        %v569 = vld [vmem:[%s470] sm:$0x1]
        %v571 = vperm.slane %v555, 0
        %v573 = vmul.f32 %v568, %v571
        %vm574 = vcmask 519168
        %v575 = vsel %vm574, %v573, 0.0
        %576 = vadd.xlane.f32.xlu0 %v575
        %v577 = vpop.xlane.xlu0 %576
        %v578 = vrot.slane %v577, 4
        %v579 = vadd.f32 %v577, %v578
        %v580 = vrot.slane %v579, 2
        %v581 = vadd.f32 %v579, %v580
        %v582 = vrot.slane %v581, 1
        %v583 = vadd.f32 %v581, %v582
        %s584 = vtos %v583
        %v585 = vstv %s584
        %v586 = vadd.f32 %v569, %v585
        %vm587 = vcmask 0
        %588 = vst.msk [vmem:[%s470] sm:$0x1] %vm587, %v586
        %v589 = vld [vmem:[%s473] sm:$0x1]
        %v590 = vsel %vm556, %v555, 0.0
        %591 = vadd.xlane.f32.xlu0 %v590
        %v592 = vpop.xlane.xlu0 %591
        %v593 = vrot.slane %v592, 4
        %v594 = vadd.f32 %v592, %v593
        %v595 = vrot.slane %v594, 2
        %v596 = vadd.f32 %v594, %v595
        %v597 = vrot.slane %v596, 1
        %v598 = vadd.f32 %v596, %v597
        %s599 = vtos %v598
        %v600 = vstv %s599
        %v601 = vadd.f32 %v589, %v600
        %602 = vst.msk [vmem:[%s473] sm:$0x1] %vm587, %v601
        %s603 = sand.u32 %s188, 1
        %s604 = scalar_lea.sflag [#allocation5], %s603
        %s605 = sand.u32 %s188, 1
        %s606 = scalar_lea.vmem [#allocation9], %s605
        %s607 = sand.u32 %s216, 1
        %s608 = scalar_lea.sflag [#allocation11], %s607
        %s609 = sand.u32 %s216, 1
        %s610 = scalar_lea.vmem [#allocation10], %s609
        %p611 = scmp.lt.s32.totalorder %s37, 1
        %s612 = scalar_select %p611, %s37, 1
        %s613 = scalar_lea.vmem %s7, %s612
        %p614 = scmp.lt.s32.totalorder %s37, 1
        %s615 = scalar_select %p614, %s37, 1
        %s616 = scalar_lea.vmem %s8, %s615
        // Predicated region
        $region57: #{tpu_custom_call.1} parent=39 // pred_check
          %p617 = pneg %p198
        $region58: #{tpu_custom_call.1} parent=39 // pred_check_branch
          %619 = sbr.rel (%p617) target = $region60
        $region59: #{tpu_custom_call.1} parent=39 // pred_region
          %621 = vsyncadd %s604, 0
          %s622 = sadd.s32 %s38, %s37
          %s623 = scalar_lea.hbm %s5, %s622
          %s625 = sshll.u32 %s606, 4
          %s626 = int_to_ptr.vmem [resolvable:$true] %s625
          %s627 = sshll.u32 %s623, 4
          %s628 = int_to_ptr.hbm [resolvable:$true] %s627
          %630 = dma.vmem_to_hbm [thread:$0]  %s626, 16, %s628, %s604
        $region60: #{tpu_custom_call.1} parent=39 // pred_fallthru
          _
        // Predicated region
        $region61: #{tpu_custom_call.1} parent=39 // pred_check
          %p631 = pneg %p226
        $region62: #{tpu_custom_call.1} parent=39 // pred_check_branch
          %633 = sbr.rel (%p631) target = $region64
        $region63: #{tpu_custom_call.1} parent=39 // pred_region
          %635 = vsyncadd %s608, 0
          %s636 = sadd.s32 %s38, %s37
          %s637 = scalar_lea.hbm %s6, %s636
          %s639 = sshll.u32 %s610, 4
          %s640 = int_to_ptr.vmem [resolvable:$true] %s639
          %s641 = sshll.u32 %s637, 4
          %s642 = int_to_ptr.hbm [resolvable:$true] %s641
          %644 = dma.vmem_to_hbm [thread:$0]  %s640, 16, %s642, %s608
        $region64: #{tpu_custom_call.1} parent=39 // pred_fallthru
          _
        // Predicated region
        $region65: #{tpu_custom_call.1} parent=39 // pred_check
          %p645 = pneg %p252
        $region66: #{tpu_custom_call.1} parent=39 // pred_check_branch
          %647 = sbr.rel (%p645) target = $region68
        $region67: #{tpu_custom_call.1} parent=39 // pred_region
          _
        $region68: #{tpu_custom_call.1} parent=39 // pred_fallthru
          _
        // Predicated region
        $region69: #{tpu_custom_call.1} parent=39 // pred_check
          %p648 = pneg %p278
        $region70: #{tpu_custom_call.1} parent=39 // pred_check_branch
          %650 = sbr.rel (%p648) target = $region72
        $region71: #{tpu_custom_call.1} parent=39 // pred_region
          _
        $region72: #{tpu_custom_call.1} parent=39 // pred_fallthru
          _
      $region40: #{tpu_custom_call.1} parent=5 // pred_fallthru
        _
      %p651 = scmp.le.s32.totalorder 2, %s28
      // Predicated region
      $region73: #{tpu_custom_call.1} parent=5 // pred_check
        %p652 = pneg %p651
      $region74: #{tpu_custom_call.1} parent=5 // pred_check_branch
        %654 = sbr.rel (%p652) target = $region76
      $region75: #{tpu_custom_call.1} parent=5 // pred_region
        %s655 = ssub.s32 %s28, 2
        // Predicated region
        $region77: #{tpu_custom_call.1} parent=75 // pred_check
          %p656 = pneg %p204
        $region78: #{tpu_custom_call.1} parent=75 // pred_check_branch
          %658 = sbr.rel (%p656) target = $region80
        $region79: #{tpu_custom_call.1} parent=75 // pred_region
          %s659 = sand.u32 %s189, 1
          %s660 = scalar_lea.sflag [#allocation5], %s659
          %s661 = sand.u32 %s189, 1
          %s662 = scalar_lea.vmem [#allocation9], %s661
          %664 = dma.done %s660, 16
        $region80: #{tpu_custom_call.1} parent=75 // pred_fallthru
          _
        // Predicated region
        $region81: #{tpu_custom_call.1} parent=75 // pred_check
          %p665 = pneg %p232
        $region82: #{tpu_custom_call.1} parent=75 // pred_check_branch
          %667 = sbr.rel (%p665) target = $region84
        $region83: #{tpu_custom_call.1} parent=75 // pred_region
          %s668 = sand.u32 %s217, 1
          %s669 = scalar_lea.sflag [#allocation11], %s668
          %s670 = sand.u32 %s217, 1
          %s671 = scalar_lea.vmem [#allocation10], %s670
          %673 = dma.done %s669, 16
        $region84: #{tpu_custom_call.1} parent=75 // pred_fallthru
          _
        // Predicated region
        $region85: #{tpu_custom_call.1} parent=75 // pred_check
          %p674 = pneg %p258
        $region86: #{tpu_custom_call.1} parent=75 // pred_check_branch
          %676 = sbr.rel (%p674) target = $region88
        $region87: #{tpu_custom_call.1} parent=75 // pred_region
          %p677 = scmp.lt.s32.totalorder %s39, 1
          %s678 = scalar_select %p677, %s39, 1
          %s679 = scalar_lea.vmem %s7, %s678
        $region88: #{tpu_custom_call.1} parent=75 // pred_fallthru
          _
        // Predicated region
        $region89: #{tpu_custom_call.1} parent=75 // pred_check
          %p680 = pneg %p284
        $region90: #{tpu_custom_call.1} parent=75 // pred_check_branch
          %682 = sbr.rel (%p680) target = $region92
        $region91: #{tpu_custom_call.1} parent=75 // pred_region
          %p683 = scmp.lt.s32.totalorder %s39, 1
          %s684 = scalar_select %p683, %s39, 1
          %s685 = scalar_lea.vmem %s8, %s684
        $region92: #{tpu_custom_call.1} parent=75 // pred_fallthru
          _
      $region76: #{tpu_custom_call.1} parent=5 // pred_fallthru
        _
    $region6: #{tpu_custom_call.1} parent=1 // loop_footer
      %s32 = sadd.s32 1, %s28
    $region7: #{tpu_custom_call.1} parent=1 // loop_footer_branch
      %27 = sbr.rel target = $region3
    $region8: #{tpu_custom_call.1} parent=1 // loop_exit
      _
    %686 = vsyncpa [#allocation4], 1
    %s687 = scalar_lea.sflag [#allocation4], 1
    %688 = vsyncpa %s687, 1
    %689 = vsyncpa [#allocation7], 1
    %s690 = scalar_lea.sflag [#allocation7], 1
    %691 = vsyncpa %s690, 1
    %692 = vsyncpa [#allocation5], 1
    %s693 = scalar_lea.sflag [#allocation5], 1
    %694 = vsyncpa %s693, 1
    %695 = vsyncpa [#allocation11], 1
    %s696 = scalar_lea.sflag [#allocation11], 1
    %697 = vsyncpa %s696, 1

</llo_original>
